<compile_context>
chip_gen: v7x
topology: tpu7x:2x2x1
jax: 0.10.0
libtpu: 0.0.40
codegen_flags: <defaults>
</compile_context>

<pallas_src>
import numpy as np
import jax
import jax.numpy as jnp
from jax.experimental import pallas as pl
from jax.experimental.pallas import tpu as pltpu


def _flip_kernel(idx0_ref, blk1_ref, sign_ref, x_ref, p1_ref, p2_ref, o_ref):
    # x_ref / o_ref blocks: (1, tile_D1, L).
    # p1: (tile_D1, tile_D1) permutation (identity or row reversal -> dim-1 flip).
    # p2: (L, L) permutation (identity or reversal of D3-chunks -> dim-2 flip).
    # sign_ref: int32 (C,), +1/-1 per OUTPUT component (post dim-0 flip).
    c = pl.program_id(0)
    s = sign_ref[c].astype(jnp.float32)
    x = x_ref[0]                                                  # (tile, L)
    y = jnp.dot(p1_ref[...], x, preferred_element_type=jnp.float32)
    y = jnp.dot(y, p2_ref[...], preferred_element_type=jnp.float32)
    o_ref[0] = (y * s).astype(o_ref.dtype)


def _pick_tile_d1(D1, L, itemsize, target_bytes=2 * 1024 * 1024):
    # Largest divisor of D1 satisfying the (8,128) block rule
    # (tile == D1 or tile % 8 == 0) while keeping the block <= target_bytes.
    valid = [d for d in range(1, D1 + 1)
             if D1 % d == 0 and (d == D1 or d % 8 == 0)]
    fitting = [d for d in valid if d * L * itemsize <= target_bytes]
    return max(fitting) if fitting else min(valid)


def random_flips_pallas(img, flags):
    """img: (C, D1, D2, D3); flags: int32 (3,), 1 iff the x/y/z flip fires."""
    C, D1, D2, D3 = img.shape
    assert C >= 3, "module negates img[0..2] along dim 0"
    L = D2 * D3
    dt = img.dtype
    itemsize = jnp.dtype(dt).itemsize

    # The dim-2 flip is an (L, L) permutation matmul on the otherwise-idle MXU.
    # For volumes with very large D2*D3 this matrix would not fit VMEM; that
    # regime needs an in-kernel reshape+reverse path instead.
    assert L * L * itemsize <= 8 * 1024 * 1024, "D2*D3 too large for this path"

    tile = _pick_tile_d1(D1, L, itemsize)
    n_blk1 = D1 // tile

    f0, f1, f2 = flags[0], flags[1], flags[2]

    # dim-0 flip: per-component source index (block size 1 along dim 0).
    ar_c = jnp.arange(C, dtype=jnp.int32)
    idx0 = jnp.where(f0 == 1, C - 1 - ar_c, ar_c).astype(jnp.int32)

    # dim-1 flip, coarse: source *block* index along D1.
    ar_b = jnp.arange(n_blk1, dtype=jnp.int32)
    blk1 = jnp.where(f1 == 1, n_blk1 - 1 - ar_b, ar_b).astype(jnp.int32)

    # dim-1 flip, fine: within-block row reversal as a permutation matrix.
    ar_t = jnp.arange(tile, dtype=jnp.int32)
    perm1 = jnp.where(f1 == 1, tile - 1 - ar_t, ar_t)
    p1 = (perm1[:, None] == ar_t[None, :]).astype(dt)             # y = p1 @ x

    # dim-2 flip: reverse D3-sized chunks inside the flattened lane axis.
    ar_l = jnp.arange(L, dtype=jnp.int32)
    src_flip = (D2 - 1 - ar_l // D3) * D3 + ar_l % D3
    src = jnp.where(f2 == 1, src_flip, ar_l)
    p2 = (ar_l[:, None] == src[None, :]).astype(dt)               # y = x @ p2

    # Per-output-component sign, precomputed (+1 / -1).
    sign = jnp.ones((C,), jnp.int32).at[:3].set(1 - 2 * flags.astype(jnp.int32))

    x3 = img.reshape(C, D1, L)                      # contiguous merge -> free

    def x_map(i, j, idx0_r, blk1_r, sign_r):
        return (idx0_r[i], blk1_r[j], 0)

    def p1_map(i, j, idx0_r, blk1_r, sign_r):
        return (0, 0)

    def p2_map(i, j, idx0_r, blk1_r, sign_r):
        return (0, 0)

    def o_map(i, j, idx0_r, blk1_r, sign_r):
        return (i, j, 0)

    grid_spec = pltpu.PrefetchScalarGridSpec(
        num_scalar_prefetch=3,
        grid=(C, n_blk1),
        in_specs=[
            pl.BlockSpec((1, tile, L), x_map),
            pl.BlockSpec((tile, tile), p1_map),
            pl.BlockSpec((L, L), p2_map),
        ],
        out_specs=pl.BlockSpec((1, tile, L), o_map),
    )

    block_bytes = tile * L * itemsize
    vmem_need = (4 * block_bytes                    # x + out, double-buffered
                 + 2 * tile * tile * itemsize       # p1
                 + 2 * L * L * itemsize             # p2
                 + (2 << 20))                       # slack
    vmem_limit = int(min(64 * 1024 * 1024, max(32 * 1024 * 1024, vmem_need)))

    total_elems = C * D1 * L
    cost = pl.CostEstimate(
        flops=int(C * n_blk1 * 2 * (tile * tile * L + tile * L * L)),
        transcendentals=0,
        bytes_accessed=int(2 * total_elems * itemsize
                           + (tile * tile + L * L) * itemsize),
    )

    out3 = pl.pallas_call(
        _flip_kernel,
        out_shape=jax.ShapeDtypeStruct((C, D1, L), dt),
        grid_spec=grid_spec,
        compiler_params=pltpu.CompilerParams(
            dimension_semantics=("parallel", "parallel"),
            vmem_limit_bytes=vmem_limit,
        ),
        cost_estimate=cost,
    )(idx0, blk1, sign, x3, p1, p2)

    return out3.reshape(C, D1, D2, D3)


def random_flips_forward(img, key, p_x=0.5, p_y=0.5, p_z=0.5,
                         x=True, y=True, z=True):
    # torch.rand(1) < p  ->  uniform(key) < p, gated by the x/y/z enables.
    u = jax.random.uniform(key, (3,))
    probs = jnp.array([p_x, p_y, p_z], dtype=jnp.float32)
    enabled = jnp.array([x, y, z], dtype=bool)
    flags = ((u < probs) & enabled).astype(jnp.int32)
    return random_flips_pallas(img, flags), flags


def _reference(img, flags):
    # Faithful numpy transcription of the torch forward (for verification).
    img = np.array(img)
    if flags[0]:
        img = img[::-1].copy()
        img[0] = -img[0]
    if flags[1]:
        img = img[:, ::-1].copy()
        img[1] = -img[1]
    if flags[2]:
        img = img[:, :, ::-1].copy()
        img[2] = -img[2]
    return img


if __name__ == "__main__":
    key = jax.random.PRNGKey(0)
    k_img, k_flip = jax.random.split(key)
    img = jax.random.normal(k_img, (4, 16, 16, 16), dtype=jnp.float32)

    flips = jax.jit(random_flips_pallas)

    # Exhaustively check every flip combination against the torch reference.
    for bits in range(8):
        flags = jnp.array([bits & 1, (bits >> 1) & 1, (bits >> 2) & 1],
                          dtype=jnp.int32)
        out = jax.block_until_ready(flips(img, flags))
        assert out.shape == img.shape and out.dtype == img.dtype
        ref = _reference(np.asarray(img), np.asarray(flags))
        np.testing.assert_allclose(np.asarray(out), ref, rtol=1e-6, atol=1e-6)

    # Random-draw path (matches torch.rand(1) < p semantics).
    out, flags = random_flips_forward(img, k_flip)
    out = jax.block_until_ready(out)
    ref = _reference(np.asarray(img), np.asarray(jax.device_get(flags)))
    np.testing.assert_allclose(np.asarray(out), ref, rtol=1e-6, atol=1e-6)

    print("KERNEL_OK")
</pallas_src>

<mosaic_0001>
module attributes {stable_mosaic.version = 11 : i64} {
  func.func @_flip_kernel(%arg0: i32, %arg1: i32, %arg2: memref<4xi32, #tpu.memory_space<smem>>, %arg3: memref<1xi32, #tpu.memory_space<smem>>, %arg4: memref<4xi32, #tpu.memory_space<smem>>, %arg5: memref<1x16x256xf32, #tpu.memory_space<vmem>>, %arg6: memref<16x16xf32, #tpu.memory_space<vmem>>, %arg7: memref<256x256xf32, #tpu.memory_space<vmem>>, %arg8: memref<1x16x256xf32, #tpu.memory_space<vmem>>) attributes {dimension_semantics = [#tpu.dimension_semantics<parallel>, #tpu.dimension_semantics<parallel>], iteration_bounds = array<i64: 4, 1>, scalar_prefetch = 3 : i64, scratch_operands = 0 : i64, tpu.core_type = #tpu.core_type<tc>, window_params = [{transform_indices = @transform_0, window_bounds = array<i64: 1, 16, 256>}, {pipeline_mode = #tpu.pipeline_mode<synchronous>, transform_indices = @transform_1, window_bounds = array<i64: 16, 16>}, {pipeline_mode = #tpu.pipeline_mode<synchronous>, transform_indices = @transform_2, window_bounds = array<i64: 256, 256>}, {transform_indices = @transform_3, window_bounds = array<i64: 1, 16, 256>}]} {
    %0 = arith.index_cast %arg0 : i32 to index
    %1 = memref.load %arg4[%0] : memref<4xi32, #tpu.memory_space<smem>>
    %2 = arith.sitofp %1 : i32 to f32
    %c0 = arith.constant 0 : index
    %c0_0 = arith.constant 0 : index
    %c0_1 = arith.constant 0 : index
    %3 = vector.load %arg5[%c0, %c0_0, %c0_1] : memref<1x16x256xf32, #tpu.memory_space<vmem>>, vector<1x16x256xf32>
    %4 = vector.shape_cast %3 : vector<1x16x256xf32> to vector<16x256xf32>
    %c0_2 = arith.constant 0 : index
    %c0_3 = arith.constant 0 : index
    %5 = vector.load %arg6[%c0_2, %c0_3] : memref<16x16xf32, #tpu.memory_space<vmem>>, vector<16x16xf32>
    %cst = arith.constant dense<0.000000e+00> : vector<16x256xf32>
    %6 = tpu.matmul %5, %4, %cst {dimension_numbers = #tpu.dot_dimension_numbers<[1], [0], [0], [1], [0, 0, 1, 1], [], []>} : vector<16x16xf32>, vector<16x256xf32>, vector<16x256xf32> -> vector<16x256xf32>
    %c0_4 = arith.constant 0 : index
    %c0_5 = arith.constant 0 : index
    %7 = vector.load %arg7[%c0_4, %c0_5] : memref<256x256xf32, #tpu.memory_space<vmem>>, vector<256x256xf32>
    %cst_6 = arith.constant dense<0.000000e+00> : vector<16x256xf32>
    %8 = tpu.matmul %6, %7, %cst_6 {dimension_numbers = #tpu.dot_dimension_numbers<[1], [0], [0], [1], [0, 0, 1, 1], [], []>} : vector<16x256xf32>, vector<256x256xf32>, vector<16x256xf32> -> vector<16x256xf32>
    %9 = vector.broadcast %2 : f32 to vector<16x256xf32>
    %10 = arith.mulf %8, %9 : vector<16x256xf32>
    %c0_7 = arith.constant 0 : index
    %c0_8 = arith.constant 0 : index
    %c0_9 = arith.constant 0 : index
    %11 = vector.load %arg8[%c0_7, %c0_8, %c0_9] : memref<1x16x256xf32, #tpu.memory_space<vmem>>, vector<1x16x256xf32>
    %12 = vector.shape_cast %11 : vector<1x16x256xf32> to vector<16x256xf32>
    %13 = vector.shape_cast %10 : vector<16x256xf32> to vector<1x16x256xf32>
    tpu.vector_store %arg8[%c0_7, %c0_8, %c0_9], %13 {strides = array<i32>} : memref<1x16x256xf32, #tpu.memory_space<vmem>>, vector<1x16x256xf32>,
    return
  }
  func.func @transform_0(%arg0: i32, %arg1: i32, %arg2: memref<4xi32, #tpu.memory_space<smem>>, %arg3: memref<1xi32, #tpu.memory_space<smem>>, %arg4: memref<4xi32, #tpu.memory_space<smem>>) -> (i32, i32, i32) {
    %0 = arith.index_cast %arg0 : i32 to index
    %1 = memref.load %arg2[%0] : memref<4xi32, #tpu.memory_space<smem>>
    %2 = arith.index_cast %arg1 : i32 to index
    %3 = memref.load %arg3[%2] : memref<1xi32, #tpu.memory_space<smem>>
    %c0_i32 = arith.constant 0 : i32
    %c0_i32_0 = arith.constant 0 : i32
    return %1, %3, %c0_i32 : i32, i32, i32
  }
  func.func @transform_1(%arg0: i32, %arg1: i32, %arg2: memref<4xi32, #tpu.memory_space<smem>>, %arg3: memref<1xi32, #tpu.memory_space<smem>>, %arg4: memref<4xi32, #tpu.memory_space<smem>>) -> (i32, i32) {
    %c0_i32 = arith.constant 0 : i32
    %c0_i32_0 = arith.constant 0 : i32
    %c0_i32_1 = arith.constant 0 : i32
    return %c0_i32, %c0_i32_0 : i32, i32
  }
  func.func @transform_2(%arg0: i32, %arg1: i32, %arg2: memref<4xi32, #tpu.memory_space<smem>>, %arg3: memref<1xi32, #tpu.memory_space<smem>>, %arg4: memref<4xi32, #tpu.memory_space<smem>>) -> (i32, i32) {
    %c0_i32 = arith.constant 0 : i32
    %c0_i32_0 = arith.constant 0 : i32
    %c0_i32_1 = arith.constant 0 : i32
    return %c0_i32, %c0_i32_0 : i32, i32
  }
  func.func @transform_3(%arg0: i32, %arg1: i32, %arg2: memref<4xi32, #tpu.memory_space<smem>>, %arg3: memref<1xi32, #tpu.memory_space<smem>>, %arg4: memref<4xi32, #tpu.memory_space<smem>>) -> (i32, i32, i32) {
    %c0_i32 = arith.constant 0 : i32
    %c0_i32_0 = arith.constant 0 : i32
    return %arg0, %arg1, %c0_i32 : i32, i32, i32
  }
}

</mosaic_0001>

<llo_original>
// kernel: random_flips_pallas.1
$region0: #{random_flips_pallas.1}
  #allocation0 [shape = 'u32[]', space=smem, size = 0x4, offset = 0x4, fixed_abs, tag = 'smem constant byte address 0x4 - core index']
  #allocation1 [shape = 'u32[144,128]{1,0:T(1,128)}', space=vmem, size = 0x12000, scoped, tag = 'internal scratch']
  #allocation2 [shape = 's32[1]{0}', space=sflag, size = 0x4, scoped, tag = 'scoped memory for random_flips_pallas.1']
  #allocation3 [shape = 'u8[512]{0}', space=smem, size = 0x200, scoped, tag = 'prefetched SMEM operand 0']
  #allocation4 [shape = 's32[1]{0:T(128)S(6)}', space=smem, size = 0x200, scoped, tag = 'prefetched SMEM operand 1']
  #allocation5 [shape = 'u8[512]{0}', space=smem, size = 0x200, scoped, tag = 'prefetched SMEM operand 2']
  %s0 = inlined_call_operand.vmem [shape: s32[4], index: 0, kind: input, shape index: {}]
  %s1 = inlined_call_operand.<no memory space> [shape: s32[1], index: 1, kind: input, shape index: {}]
  %s2 = inlined_call_operand.vmem [shape: s32[4], index: 2, kind: input, shape index: {}]
  %s3 = inlined_call_operand.vmem [shape: f32[4,16,256], index: 3, kind: input, shape index: {}]
  %s4 = inlined_call_operand.vmem [shape: f32[16,16], index: 4, kind: input, shape index: {}]
  %s5 = inlined_call_operand.vmem [shape: f32[256,256], index: 5, kind: input, shape index: {}]
  %s6 = inlined_call_operand.vmem [shape: f32[4,16,256], index: 6, kind: output, shape index: {}]
  %s7 = sld [smem:[#allocation0]]
  $region45: #{random_flips_pallas.1} parent=0
    _
  %s9 = ssub.s32 1, %s7
  %s10 = scalar_select 0, %s9, %s7
  %s11 = sshll.u32 %s0, 4
  %s12 = int_to_ptr.vmem [resolvable:$true] %s11
  %14 = dma.vmem_to_smem %s12, 16, [#allocation3], [#allocation2]
  %15 = sst [smem:[#allocation4]] %s1
  %s16 = sshll.u32 %s2, 4
  %s17 = int_to_ptr.vmem [resolvable:$true] %s16
  %19 = dma.vmem_to_smem %s17, 16, [#allocation5], [#allocation2]
  %20 = dma.done [#allocation2], 32
  %21 = sfence
  loop: start=0, step=1, limit=6
  $region2: #{random_flips_pallas.1} parent=0 // loop_pre_header
    _
  $region3: #{random_flips_pallas.1} parent=0 // loop_header
    %s23 = sphi 0, %s27
    %p24 = scmp.ge.s32.totalorder %s23, 6
    %s30 = sphi 0, %s42
    %s31 = sphi 0, %s38
    %s32 = sphi 0, %s30
    %s33 = sphi 0, %s31
    %s34 = sphi 0, %s32
    %s35 = sphi 0, %s33
    %s51 = sphi 0, %s53
    %s54 = sphi 0, %s51
    %s55 = sphi 0, %s54
    %s71 = sphi 0, %s55
    %s75 = sphi 0, %s75
    %s77 = sphi 0, %s75
    %s78 = sphi 0, %s77
    %s92 = sphi 0, %s78
    %s96 = sphi 0, %s96
    %s98 = sphi 0, %s96
    %s99 = sphi 0, %s98
    %s113 = sphi 0, %s99
    %s121 = sphi 0, %s123
    %s124 = sphi 0, %s121
    %s125 = sphi 0, %s124
    %s141 = sphi 0, %s125
  $region4: #{random_flips_pallas.1} parent=0 // loop_header_branch
    %26 = sbr.rel (%p24) target = $region8
  $region5: #{random_flips_pallas.1} parent=0 // loop_body
    %s28 = ssub.s32 %s23, 1
    %s29 = ssub.s32 %s23, 2
    %s36 = sadd.s32 1, %s31
    %p37 = scmp.ge.s32.totalorder %s36, 1
    %s38 = scalar_select %p37, 0, %s36
    %s39 = sadd.s32 1, %s30
    %s40 = scalar_select %p37, %s39, %s30
    %p41 = scmp.ge.s32.totalorder %s40, 4
    %s42 = scalar_select %p41, 0, %s40
    %s43 = sld [smem:[#allocation3 + %s30]]
    %s44 = sld [smem:[#allocation4 + %s31]]
    %s45 = sld [smem:[#allocation3 + %s42]]
    %s46 = sld [smem:[#allocation4 + %s38]]
    %s47 = ssub.s32 %s43, %s45
    %s48 = ssub.s32 %s44, %s46
    %s49 = sor.u32 %s47, %s48
    %p50 = scmp.eq.s32.totalorder %s49, 0
    %s52 = sadd.s32 %s51, 1
    %s53 = scalar_select %p50, %s51, %s52
    %p56 = pneg %p50
    %p57 = scmp.eq.s32.totalorder %s23, 3
    %p58 = por %p56, %p57
    %p59 = scmp.ne.s32.totalorder %s51, %s54
    %p60 = scmp.eq.s32.totalorder %s23, 0
    %p61 = por %p59, %p60
    %p62 = scmp.ne.s32.totalorder %s51, %s54
    %p63 = scmp.eq.s32.totalorder %s28, 3
    %p64 = por %p62, %p63
    %p65 = scmp.ne.s32.totalorder %s54, %s55
    %p66 = scmp.eq.s32.totalorder %s28, 0
    %p67 = por %p65, %p66
    %p68 = scmp.ne.s32.totalorder %s54, %s55
    %p69 = scmp.eq.s32.totalorder %s29, 3
    %p70 = por %p68, %p69
    %p72 = scmp.ne.s32.totalorder %s55, %s71
    %p73 = scmp.eq.s32.totalorder %s29, 0
    %p74 = por %p72, %p73
    %s76 = sadd.s32 %s75, 1
    %p79 = scmp.eq.s32.totalorder %s23, 3
    %p80 = scmp.ne.s32.totalorder %s75, %s77
    %p81 = scmp.eq.s32.totalorder %s23, 0
    %p82 = por %p80, %p81
    %p83 = scmp.ne.s32.totalorder %s75, %s77
    %p84 = scmp.eq.s32.totalorder %s28, 3
    %p85 = por %p83, %p84
    %p86 = scmp.ne.s32.totalorder %s77, %s78
    %p87 = scmp.eq.s32.totalorder %s28, 0
    %p88 = por %p86, %p87
    %p89 = scmp.ne.s32.totalorder %s77, %s78
    %p90 = scmp.eq.s32.totalorder %s29, 3
    %p91 = por %p89, %p90
    %p93 = scmp.ne.s32.totalorder %s78, %s92
    %p94 = scmp.eq.s32.totalorder %s29, 0
    %p95 = por %p93, %p94
    %s97 = sadd.s32 %s96, 1
    %p100 = scmp.eq.s32.totalorder %s23, 3
    %p101 = scmp.ne.s32.totalorder %s96, %s98
    %p102 = scmp.eq.s32.totalorder %s23, 0
    %p103 = por %p101, %p102
    %p104 = scmp.ne.s32.totalorder %s96, %s98
    %p105 = scmp.eq.s32.totalorder %s28, 3
    %p106 = por %p104, %p105
    %p107 = scmp.ne.s32.totalorder %s98, %s99
    %p108 = scmp.eq.s32.totalorder %s28, 0
    %p109 = por %p107, %p108
    %p110 = scmp.ne.s32.totalorder %s98, %s99
    %p111 = scmp.eq.s32.totalorder %s29, 3
    %p112 = por %p110, %p111
    %p114 = scmp.ne.s32.totalorder %s99, %s113
    %p115 = scmp.eq.s32.totalorder %s29, 0
    %p116 = por %p114, %p115
    %s117 = ssub.s32 %s30, %s42
    %s118 = ssub.s32 %s31, %s38
    %s119 = sor.u32 %s117, %s118
    %p120 = scmp.eq.s32.totalorder %s119, 0
    %s122 = sadd.s32 %s121, 1
    %s123 = scalar_select %p120, %s121, %s122
    %p126 = pneg %p120
    %p127 = scmp.eq.s32.totalorder %s23, 3
    %p128 = por %p126, %p127
    %p129 = scmp.ne.s32.totalorder %s121, %s124
    %p130 = scmp.eq.s32.totalorder %s23, 0
    %p131 = por %p129, %p130
    %p132 = scmp.ne.s32.totalorder %s121, %s124
    %p133 = scmp.eq.s32.totalorder %s28, 3
    %p134 = por %p132, %p133
    %p135 = scmp.ne.s32.totalorder %s124, %s125
    %p136 = scmp.eq.s32.totalorder %s28, 0
    %p137 = por %p135, %p136
    %p138 = scmp.ne.s32.totalorder %s124, %s125
    %p139 = scmp.eq.s32.totalorder %s29, 3
    %p140 = por %p138, %p139
    %p142 = scmp.ne.s32.totalorder %s125, %s141
    %p143 = scmp.eq.s32.totalorder %s29, 0
    %p144 = por %p142, %p143
    %p145 = scmp.le.s32.totalorder 1, %s23
    %p146 = scmp.lt.s32.totalorder %s23, 5
    %p147 = pnand %p145, %p146
    %p148 = pneg %p147
    // Predicated region
    $region9: #{random_flips_pallas.1} parent=5 // pred_check
      _
    $region10: #{random_flips_pallas.1} parent=5 // pred_check_branch
      %150 = sbr.rel (%p147) target = $region12
    $region11: #{random_flips_pallas.1} parent=5 // pred_region
      %s151 = ssub.s32 %s23, 1
      // Predicated region
      $region13: #{random_flips_pallas.1} parent=11 // pred_check
        %p152 = pneg %p88
      $region14: #{random_flips_pallas.1} parent=11 // pred_check_branch
        %154 = sbr.rel (%p152) target = $region16
      $region15: #{random_flips_pallas.1} parent=11 // pred_region
        _
      $region16: #{random_flips_pallas.1} parent=11 // pred_fallthru
        _
      // Predicated region
      $region17: #{random_flips_pallas.1} parent=11 // pred_check
        %p155 = pneg %p109
      $region18: #{random_flips_pallas.1} parent=11 // pred_check_branch
        %157 = sbr.rel (%p155) target = $region20
      $region19: #{random_flips_pallas.1} parent=11 // pred_region
        _
      $region20: #{random_flips_pallas.1} parent=11 // pred_fallthru
        _
    $region12: #{random_flips_pallas.1} parent=5 // pred_fallthru
      _
    %p158 = scmp.lt.s32.totalorder %s23, 4
    // Predicated region
    $region21: #{random_flips_pallas.1} parent=5 // pred_check
      %p159 = pneg %p158
    $region22: #{random_flips_pallas.1} parent=5 // pred_check_branch
      %161 = sbr.rel (%p159) target = $region24
    $region23: #{random_flips_pallas.1} parent=5 // pred_region
      // Predicated region
      $region25: #{random_flips_pallas.1} parent=23 // pred_check
        %p162 = pneg %p61
      $region26: #{random_flips_pallas.1} parent=23 // pred_check_branch
        %164 = sbr.rel (%p162) target = $region28
      $region27: #{random_flips_pallas.1} parent=23 // pred_region
        %s165 = sld [smem:[#allocation3 + %s30]]
        %s166 = sld [smem:[#allocation4 + %s31]]
        %s167 = smul.u32 2, %s166
        %p168 = scmp.lt.s32.totalorder %s165, 3
        %s169 = scalar_select %p168, %s165, 3
        %p170 = scmp.lt.s32.totalorder %s167, 1
        %s171 = scalar_select %p170, %s167, 1
        %s172 = smul.addr %s171, 2
        %s173 = smul.addr %s169, 4
        %s174 = sadd.s32 %s172, %s173
        %s175 = smul.addr %s174, 8
        %s176 = scalar_lea.vmem %s3, %s175
        %s177 = sld [smem:[#allocation3 + %s30]]
        %s178 = sld [smem:[#allocation4 + %s31]]
        %s179 = smul.u32 2, %s178
      $region28: #{random_flips_pallas.1} parent=23 // pred_fallthru
        _
    $region24: #{random_flips_pallas.1} parent=5 // pred_fallthru
      _
    %p180 = scmp.le.s32.totalorder 1, %s23
    %p181 = scmp.lt.s32.totalorder %s23, 5
    %p182 = pnand %p180, %p181
    %p183 = pneg %p182
    // Predicated region
    $region29: #{random_flips_pallas.1} parent=5 // pred_check
      _
    $region30: #{random_flips_pallas.1} parent=5 // pred_check_branch
      %185 = sbr.rel (%p182) target = $region32
    $region31: #{random_flips_pallas.1} parent=5 // pred_region
      %s186 = ssub.s32 %s23, 1
      %s187 = sld [smem:[#allocation3 + %s32]]
      %s188 = sld [smem:[#allocation4 + %s33]]
      %s189 = smul.u32 2, %s188
      %p190 = scmp.lt.s32.totalorder %s187, 3
      %s191 = scalar_select %p190, %s187, 3
      %p192 = scmp.lt.s32.totalorder %s189, 1
      %s193 = scalar_select %p192, %s189, 1
      %s194 = smul.addr %s193, 2
      %s195 = smul.addr %s191, 4
      %s196 = sadd.s32 %s194, %s195
      %s197 = smul.addr %s196, 8
      %s198 = scalar_lea.vmem %s3, %s197
      %p199 = pneg %p67
      %p200 = pneg %p64
      %p201 = pneg %p88
      %p202 = pneg %p85
      %p203 = pneg %p109
      %p204 = pneg %p106
      %p205 = pneg %p137
      %p206 = pneg %p134
      %s207 = smul.u32 2, %s33
      %p208 = scmp.lt.s32.totalorder %s32, 3
      %s209 = scalar_select %p208, %s32, 3
      %p210 = scmp.lt.s32.totalorder %s207, 1
      %s211 = scalar_select %p210, %s207, 1
      %s212 = smul.addr %s211, 2
      %s213 = smul.addr %s209, 4
      %s214 = sadd.s32 %s212, %s213
      %s215 = smul.addr %s214, 8
      %s216 = scalar_lea.vmem %s6, %s215
      %s217 = sld [smem:[#allocation3 + %s32]]
      %s218 = sld [smem:[#allocation4 + %s33]]
      %s219 = smul.u32 2, %s218
      %p220 = scmp.lt.s32.totalorder %s217, 3
      %s221 = scalar_select %p220, %s217, 3
      %p222 = scmp.lt.s32.totalorder %s219, 1
      %s223 = scalar_select %p222, %s219, 1
      %s224 = smul.addr %s223, 2
      %s225 = smul.addr %s221, 4
      %s226 = sadd.s32 %s224, %s225
      %s227 = smul.addr %s226, 8
      %s228 = scalar_lea.vmem %s3, %s227
      %s229 = sld [smem:[#allocation3 + %s32]]
      %s230 = sld [smem:[#allocation4 + %s33]]
      %s231 = smul.u32 2, %s230
      %s232 = smul.u32 2, %s33
      %p233 = scmp.lt.s32.totalorder %s32, 3
      %s234 = scalar_select %p233, %s32, 3
      %p235 = scmp.lt.s32.totalorder %s232, 1
      %s236 = scalar_select %p235, %s232, 1
      %s237 = smul.addr %s236, 2
      %s238 = smul.addr %s234, 4
      %s239 = sadd.s32 %s237, %s238
      %s240 = smul.addr %s239, 8
      %s241 = scalar_lea.vmem %s6, %s240
      %s242 = smul.u32 2, %s33
      %s243 = sld [smem:[#allocation5 + %s32]]
      %s244 = scvt.s32.f32 %s243
      %v245 = vld [vmem:[%s228] sm:$0xff]
      %v246 = vld [vmem:[%s228 + $0x8] sm:$0xff]
      %v247 = vld [vmem:[%s228 + $0x10] sm:$0xff]
      %v248 = vld [vmem:[%s228 + $0x18] sm:$0xff]
      %v249 = vld [vmem:[%s4] sm:$0xff]
      %v250 = vld [vmem:[%s4 + $0x8] sm:$0xff]
      %vm251 = vcmask 130048
      %v253 = vsel %vm251, %v249, 0
      %v256 = vsel %vm251, %v250, 0
      %258 = vmatprep.subr.mxu0 %v246
      %259 = vmatpush1.msra.mxu0 %v245
      %260 = vmatprep.subr.mxu0 %v248
      %261 = vmatpush1.msra.mxu0 %v247
      %262 = vmatprep.subr.mxu0 0.0
      %263 = vmatpush1.msra.mxu0 0.0
      %264 = vmatprep.subr.mxu0 0.0
      %265 = vmatpush1.msra.mxu0 0.0
      %266 = vmatprep.subr.mxu0 0.0
      %267 = vmatpush1.msra.mxu0 0.0
      %268 = vmatprep.subr.mxu0 0.0
      %269 = vmatpush1.msra.mxu0 0.0
      %270 = vmatprep.subr.mxu0 0.0
      %271 = vmatpush1.msra.mxu0 0.0
      %272 = vmatprep.subr.mxu0 0.0
      %273 = vmatpush1.msra.mxu0 0.0
      %274 = vmatprep.subr.mxu0 0.0
      %275 = vmatpush1.msra.mxu0 0.0
      %276 = vmatprep.subr.mxu0 0.0
      %277 = vmatpush1.msra.mxu0 0.0
      %278 = vmatprep.subr.mxu0 0.0
      %279 = vmatpush1.msra.mxu0 0.0
      %280 = vmatprep.subr.mxu0 0.0
      %281 = vmatpush1.msra.mxu0 0.0
      %282 = vmatprep.subr.mxu0 0.0
      %283 = vmatpush1.msra.mxu0 0.0
      %284 = vmatprep.subr.mxu0 0.0
      %285 = vmatpush1.msra.mxu0 0.0
      %286 = vmatprep.subr.mxu0 0.0
      %287 = vmatpush1.msra.mxu0 0.0
      %288 = vmatprep.subr.mxu0 0.0
      %289 = vmatpush1.msra.mxu0 0.0
      %290 = vmatprep.subr.mxu0 0.0
      %291 = vmatpush1.msra.mxu0 0.0
      %292 = vmatprep.subr.mxu0 0.0
      %293 = vmatpush1.msra.mxu0 0.0
      %294 = vmatprep.subr.mxu0 0.0
      %295 = vmatpush1.msra.mxu0 0.0
      %296 = vmatprep.subr.mxu0 0.0
      %297 = vmatpush1.msra.mxu0 0.0
      %298 = vmatprep.subr.mxu0 0.0
      %299 = vmatpush1.msra.mxu0 0.0
      %300 = vmatprep.subr.mxu0 0.0
      %301 = vmatpush1.msra.mxu0 0.0
      %302 = vmatprep.subr.mxu0 0.0
      %303 = vmatpush1.msra.mxu0 0.0
      %304 = vmatprep.subr.mxu0 0.0
      %305 = vmatpush1.msra.mxu0 0.0
      %306 = vmatprep.subr.mxu0 0.0
      %307 = vmatpush1.msra.mxu0 0.0
      %308 = vmatprep.subr.mxu0 0.0
      %309 = vmatpush1.msra.mxu0 0.0
      %310 = vmatprep.subr.mxu0 0.0
      %311 = vmatpush1.msra.mxu0 0.0
      %312 = vmatprep.subr.mxu0 0.0
      %313 = vmatpush1.msra.mxu0 0.0
      %314 = vmatprep.subr.mxu0 0.0
      %315 = vmatpush1.msra.mxu0 0.0
      %316 = vmatprep.subr.mxu0 0.0
      %317 = vmatpush1.msra.mxu0 0.0
      %318 = vmatprep.subr.mxu0 0.0
      %319 = vmatpush1.msra.mxu0 0.0
      %320 = vmatprep.subr.mxu0 0.0
      %321 = vmatpush1.msra.mxu0 0.0
      %322 = vmatprep.mubr.f32.mxu0 0.0
      %323 = vmatmul.mubr.f32.gmra.mrb[0].mxu0 %v253
      %v324 = vpop.f32.mrb[0].mxu0
      %v325 = vadd.f32 0.0, %v324
      %v326 = vpop.f32.mrb[0].mxu0
      %v327 = vadd.f32 0.0, %v326
      %328 = vmatprep.mubr.f32.mxu0 0.0
      %329 = vmatmul.mubr.f32.gmra.mrb[0].mxu0 %v256
      %v330 = vpop.f32.mrb[0].mxu0
      %v331 = vadd.f32 0.0, %v330
      %v332 = vpop.f32.mrb[0].mxu0
      %v333 = vadd.f32 0.0, %v332
      %334 = vdwg.mxu0
      %v335 = vld [vmem:[%s5] sm:$0xff]
      %v336 = vld [vmem:[%s5 + $0x8] sm:$0xff]
      %v337 = vld [vmem:[%s5 + $0x10] sm:$0xff]
      %v338 = vld [vmem:[%s5 + $0x18] sm:$0xff]
      %v339 = vld [vmem:[%s5 + $0x20] sm:$0xff]
      %v340 = vld [vmem:[%s5 + $0x28] sm:$0xff]
      %v341 = vld [vmem:[%s5 + $0x30] sm:$0xff]
      %v342 = vld [vmem:[%s5 + $0x38] sm:$0xff]
      %v343 = vld [vmem:[%s5 + $0x40] sm:$0xff]
      %v344 = vld [vmem:[%s5 + $0x48] sm:$0xff]
      %v345 = vld [vmem:[%s5 + $0x50] sm:$0xff]
      %v346 = vld [vmem:[%s5 + $0x58] sm:$0xff]
      %v347 = vld [vmem:[%s5 + $0x60] sm:$0xff]
      %v348 = vld [vmem:[%s5 + $0x68] sm:$0xff]
      %v349 = vld [vmem:[%s5 + $0x70] sm:$0xff]
      %v350 = vld [vmem:[%s5 + $0x78] sm:$0xff]
      %v351 = vld [vmem:[%s5 + $0x80] sm:$0xff]
      %v352 = vld [vmem:[%s5 + $0x88] sm:$0xff]
      %v353 = vld [vmem:[%s5 + $0x90] sm:$0xff]
      %v354 = vld [vmem:[%s5 + $0x98] sm:$0xff]
      %v355 = vld [vmem:[%s5 + $0xa0] sm:$0xff]
      %v356 = vld [vmem:[%s5 + $0xa8] sm:$0xff]
      %v357 = vld [vmem:[%s5 + $0xb0] sm:$0xff]
      %v358 = vld [vmem:[%s5 + $0xb8] sm:$0xff]
      %v359 = vld [vmem:[%s5 + $0xc0] sm:$0xff]
      %v360 = vld [vmem:[%s5 + $0xc8] sm:$0xff]
      %v361 = vld [vmem:[%s5 + $0xd0] sm:$0xff]
      %v362 = vld [vmem:[%s5 + $0xd8] sm:$0xff]
      %v363 = vld [vmem:[%s5 + $0xe0] sm:$0xff]
      %v364 = vld [vmem:[%s5 + $0xe8] sm:$0xff]
      %v365 = vld [vmem:[%s5 + $0xf0] sm:$0xff]
      %v366 = vld [vmem:[%s5 + $0xf8] sm:$0xff]
      %v367 = vld [vmem:[%s5 + $0x100] sm:$0xff]
      %v368 = vld [vmem:[%s5 + $0x108] sm:$0xff]
      %v369 = vld [vmem:[%s5 + $0x110] sm:$0xff]
      %v370 = vld [vmem:[%s5 + $0x118] sm:$0xff]
      %v371 = vld [vmem:[%s5 + $0x120] sm:$0xff]
      %v372 = vld [vmem:[%s5 + $0x128] sm:$0xff]
      %v373 = vld [vmem:[%s5 + $0x130] sm:$0xff]
      %v374 = vld [vmem:[%s5 + $0x138] sm:$0xff]
      %v375 = vld [vmem:[%s5 + $0x140] sm:$0xff]
      %v376 = vld [vmem:[%s5 + $0x148] sm:$0xff]
      %v377 = vld [vmem:[%s5 + $0x150] sm:$0xff]
      %v378 = vld [vmem:[%s5 + $0x158] sm:$0xff]
      %v379 = vld [vmem:[%s5 + $0x160] sm:$0xff]
      %v380 = vld [vmem:[%s5 + $0x168] sm:$0xff]
      %v381 = vld [vmem:[%s5 + $0x170] sm:$0xff]
      %v382 = vld [vmem:[%s5 + $0x178] sm:$0xff]
      %v383 = vld [vmem:[%s5 + $0x180] sm:$0xff]
      %v384 = vld [vmem:[%s5 + $0x188] sm:$0xff]
      %v385 = vld [vmem:[%s5 + $0x190] sm:$0xff]
      %v386 = vld [vmem:[%s5 + $0x198] sm:$0xff]
      %v387 = vld [vmem:[%s5 + $0x1a0] sm:$0xff]
      %v388 = vld [vmem:[%s5 + $0x1a8] sm:$0xff]
      %v389 = vld [vmem:[%s5 + $0x1b0] sm:$0xff]
      %v390 = vld [vmem:[%s5 + $0x1b8] sm:$0xff]
      %v391 = vld [vmem:[%s5 + $0x1c0] sm:$0xff]
      %v392 = vld [vmem:[%s5 + $0x1c8] sm:$0xff]
      %v393 = vld [vmem:[%s5 + $0x1d0] sm:$0xff]
      %v394 = vld [vmem:[%s5 + $0x1d8] sm:$0xff]
      %v395 = vld [vmem:[%s5 + $0x1e0] sm:$0xff]
      %v396 = vld [vmem:[%s5 + $0x1e8] sm:$0xff]
      %v397 = vld [vmem:[%s5 + $0x1f0] sm:$0xff]
      %v398 = vld [vmem:[%s5 + $0x1f8] sm:$0xff]
      %399 = vmatprep.subr.mxu0 %v336
      %400 = vmatpush1.msra.mxu0 %v335
      %401 = vmatprep.subr.mxu0 %v338
      %402 = vmatpush1.msra.mxu0 %v337
      %403 = vmatprep.subr.mxu0 %v340
      %404 = vmatpush1.msra.mxu0 %v339
      %405 = vmatprep.subr.mxu0 %v342
      %406 = vmatpush1.msra.mxu0 %v341
      %407 = vmatprep.subr.mxu0 %v344
      %408 = vmatpush1.msra.mxu0 %v343
      %409 = vmatprep.subr.mxu0 %v346
      %410 = vmatpush1.msra.mxu0 %v345
      %411 = vmatprep.subr.mxu0 %v348
      %412 = vmatpush1.msra.mxu0 %v347
      %413 = vmatprep.subr.mxu0 %v350
      %414 = vmatpush1.msra.mxu0 %v349
      %415 = vmatprep.subr.mxu0 %v352
      %416 = vmatpush1.msra.mxu0 %v351
      %417 = vmatprep.subr.mxu0 %v354
      %418 = vmatpush1.msra.mxu0 %v353
      %419 = vmatprep.subr.mxu0 %v356
      %420 = vmatpush1.msra.mxu0 %v355
      %421 = vmatprep.subr.mxu0 %v358
      %422 = vmatpush1.msra.mxu0 %v357
      %423 = vmatprep.subr.mxu0 %v360
      %424 = vmatpush1.msra.mxu0 %v359
      %425 = vmatprep.subr.mxu0 %v362
      %426 = vmatpush1.msra.mxu0 %v361
      %427 = vmatprep.subr.mxu0 %v364
      %428 = vmatpush1.msra.mxu0 %v363
      %429 = vmatprep.subr.mxu0 %v366
      %430 = vmatpush1.msra.mxu0 %v365
      %431 = vmatprep.subr.mxu0 %v368
      %432 = vmatpush1.msra.mxu0 %v367
      %433 = vmatprep.subr.mxu0 %v370
      %434 = vmatpush1.msra.mxu0 %v369
      %435 = vmatprep.subr.mxu0 %v372
      %436 = vmatpush1.msra.mxu0 %v371
      %437 = vmatprep.subr.mxu0 %v374
      %438 = vmatpush1.msra.mxu0 %v373
      %439 = vmatprep.subr.mxu0 %v376
      %440 = vmatpush1.msra.mxu0 %v375
      %441 = vmatprep.subr.mxu0 %v378
      %442 = vmatpush1.msra.mxu0 %v377
      %443 = vmatprep.subr.mxu0 %v380
      %444 = vmatpush1.msra.mxu0 %v379
      %445 = vmatprep.subr.mxu0 %v382
      %446 = vmatpush1.msra.mxu0 %v381
      %447 = vmatprep.subr.mxu0 %v384
      %448 = vmatpush1.msra.mxu0 %v383
      %449 = vmatprep.subr.mxu0 %v386
      %450 = vmatpush1.msra.mxu0 %v385
      %451 = vmatprep.subr.mxu0 %v388
      %452 = vmatpush1.msra.mxu0 %v387
      %453 = vmatprep.subr.mxu0 %v390
      %454 = vmatpush1.msra.mxu0 %v389
      %455 = vmatprep.subr.mxu0 %v392
      %456 = vmatpush1.msra.mxu0 %v391
      %457 = vmatprep.subr.mxu0 %v394
      %458 = vmatpush1.msra.mxu0 %v393
      %459 = vmatprep.subr.mxu0 %v396
      %460 = vmatpush1.msra.mxu0 %v395
      %461 = vmatprep.subr.mxu0 %v398
      %462 = vmatpush1.msra.mxu0 %v397
      %463 = vmatprep.mubr.f32.mxu0 %v327
      %464 = vmatmul.mubr.f32.gmra.mrb[0].mxu0 %v325
      %v465 = vpop.f32.mrb[0].mxu0
      %v466 = vadd.f32 0.0, %v465
      %v467 = vpop.f32.mrb[0].mxu0
      %v468 = vadd.f32 0.0, %v467
      %469 = vmatprep.mubr.f32.mxu0 %v333
      %470 = vmatmul.mubr.f32.gmra.mrb[0].mxu0 %v331
      %v471 = vpop.f32.mrb[0].mxu0
      %v472 = vadd.f32 0.0, %v471
      %v473 = vpop.f32.mrb[0].mxu0
      %v474 = vadd.f32 0.0, %v473
      %475 = vdwg.mxu0
      %v476 = vstv %s244
      %v477 = vmul.f32 %v466, %v476
      %v478 = vmul.f32 %v468, %v476
      %v479 = vmul.f32 %v472, %v476
      %v480 = vmul.f32 %v474, %v476
      %481 = vst [vmem:[%s241] sm:$0xff] %v477
      %482 = vst [vmem:[%s241 + $0x8] sm:$0xff] %v478
      %483 = vst [vmem:[%s241 + $0x10] sm:$0xff] %v479
      %484 = vst [vmem:[%s241 + $0x18] sm:$0xff] %v480
      %s485 = smul.u32 2, %s33
      %p486 = scmp.lt.s32.totalorder %s32, 3
      %s487 = scalar_select %p486, %s32, 3
      %p488 = scmp.lt.s32.totalorder %s485, 1
      %s489 = scalar_select %p488, %s485, 1
      %s490 = smul.addr %s489, 2
      %s491 = smul.addr %s487, 4
      %s492 = sadd.s32 %s490, %s491
      %s493 = smul.addr %s492, 8
      %s494 = scalar_lea.vmem %s6, %s493
      // Predicated region
      $region33: #{random_flips_pallas.1} parent=31 // pred_check
        %p495 = pneg %p134
      $region34: #{random_flips_pallas.1} parent=31 // pred_check_branch
        %497 = sbr.rel (%p495) target = $region36
      $region35: #{random_flips_pallas.1} parent=31 // pred_region
        %s498 = smul.u32 2, %s33
      $region36: #{random_flips_pallas.1} parent=31 // pred_fallthru
        _
    $region32: #{random_flips_pallas.1} parent=5 // pred_fallthru
      _
    %p499 = scmp.le.s32.totalorder 2, %s23
    // Predicated region
    $region37: #{random_flips_pallas.1} parent=5 // pred_check
      %p500 = pneg %p499
    $region38: #{random_flips_pallas.1} parent=5 // pred_check_branch
      %502 = sbr.rel (%p500) target = $region40
    $region39: #{random_flips_pallas.1} parent=5 // pred_region
      %s503 = ssub.s32 %s23, 2
      // Predicated region
      $region41: #{random_flips_pallas.1} parent=39 // pred_check
        %p504 = pneg %p140
      $region42: #{random_flips_pallas.1} parent=39 // pred_check_branch
        %506 = sbr.rel (%p504) target = $region44
      $region43: #{random_flips_pallas.1} parent=39 // pred_region
        %s507 = smul.u32 2, %s35
        %p508 = scmp.lt.s32.totalorder %s34, 3
        %s509 = scalar_select %p508, %s34, 3
        %p510 = scmp.lt.s32.totalorder %s507, 1
        %s511 = scalar_select %p510, %s507, 1
        %s512 = smul.addr %s511, 2
        %s513 = smul.addr %s509, 4
        %s514 = sadd.s32 %s512, %s513
        %s515 = smul.addr %s514, 8
        %s516 = scalar_lea.vmem %s6, %s515
      $region44: #{random_flips_pallas.1} parent=39 // pred_fallthru
        _
    $region40: #{random_flips_pallas.1} parent=5 // pred_fallthru
      _
  $region6: #{random_flips_pallas.1} parent=0 // loop_footer
    %s27 = sadd.s32 1, %s23
  $region7: #{random_flips_pallas.1} parent=0 // loop_footer_branch
    %22 = sbr.rel target = $region3
  $region8: #{random_flips_pallas.1} parent=0 // loop_exit
    _

</llo_original>
